<compile_context>
chip_gen: v7x
topology: tpu7x:2x2x1
jax: 0.10.0
libtpu: 0.0.40
codegen_flags: <defaults>
</compile_context>

<pallas_src>
import jax
import jax.numpy as jnp
from jax.experimental import pallas as pl
from jax.experimental.pallas import tpu as pltpu


# ----------------------------------------------------------------------------- helpers
def _round_up(x, m):
    return ((x + m - 1) // m) * m


def _pad2d(a, rows, cols):
    return jnp.pad(a, ((0, rows - a.shape[0]), (0, cols - a.shape[1])))


def _vmem_limit_bytes(tm, tk, f_max):
    # 2x double-buffered A tiles (bf16) + 2x M tiles (bf16) + 2x out tiles (f32)
    # + f32 accumulator + resident weight (bf16) + bias.
    est = (2 * tm * tk * 2 + 2 * tk * f_max * 2 + 2 * tm * f_max * 4
           + tm * f_max * 4 + f_max * f_max * 2 + 128 * f_max * 4)
    return int(min(48 * 1024 * 1024, max(16 * 1024 * 1024, 4 * est)))


# ----------------------------------------------------------------------------- kernels
def _make_propagate_kernel(fuse_weight: bool, apply_relu: bool):
    """Tiled A_hat @ M with f32 accumulator.

    fuse_weight=True : epilogue computes (acc @ W) + b  (propagate-then-transform)
    fuse_weight=False: epilogue computes  acc + b       (M was pre-transformed)
    """
    if fuse_weight:
        def kernel(a_ref, m_ref, w_ref, b_ref, o_ref, acc_ref):
            @pl.when(pl.program_id(1) == 0)
            def _():
                acc_ref[...] = jnp.zeros_like(acc_ref)

            acc_ref[...] += jnp.dot(a_ref[...], m_ref[...],
                                    preferred_element_type=jnp.float32)

            @pl.when(pl.program_id(1) == pl.num_programs(1) - 1)
            def _():
                out = jnp.dot(acc_ref[...].astype(jnp.bfloat16), w_ref[...],
                              preferred_element_type=jnp.float32) + b_ref[...]
                if apply_relu:
                    out = jnp.maximum(out, 0.0)
                o_ref[...] = out.astype(o_ref.dtype)
        return kernel

    def kernel(a_ref, m_ref, b_ref, o_ref, acc_ref):
        @pl.when(pl.program_id(1) == 0)
        def _():
            acc_ref[...] = jnp.zeros_like(acc_ref)

        acc_ref[...] += jnp.dot(a_ref[...], m_ref[...],
                                preferred_element_type=jnp.float32)

        @pl.when(pl.program_id(1) == pl.num_programs(1) - 1)
        def _():
            out = acc_ref[...] + b_ref[...]
            if apply_relu:
                out = jnp.maximum(out, 0.0)
            o_ref[...] = out.astype(o_ref.dtype)
    return kernel


def _transform_kernel(m_ref, w_ref, o_ref):
    """Row-tiled feature transform  M @ W  (bf16 in, f32 accumulate)."""
    o_ref[...] = jnp.dot(m_ref[...], w_ref[...],
                         preferred_element_type=jnp.float32).astype(o_ref.dtype)


# ----------------------------------------------------------------------------- one GCN layer
def _gcn_layer(a_bf16, m_bf16, w_bf16, b_f32, *, relu, out_dtype, tm, tk, vmem_limit):
    n_pad = a_bf16.shape[0]
    fin = m_bf16.shape[1]
    fout = w_bf16.shape[1]
    grid2 = (n_pad // tm, n_pad // tk)

    if fin <= fout:
        # Propagate the narrower matrix first, fuse W / bias / relu in the epilogue.
        return pl.pallas_call(
            _make_propagate_kernel(fuse_weight=True, apply_relu=relu),
            out_shape=jax.ShapeDtypeStruct((n_pad, fout), out_dtype),
            grid=grid2,
            in_specs=[
                pl.BlockSpec((tm, tk), lambda i, k: (i, k)),      # A_hat tiles
                pl.BlockSpec((tk, fin), lambda i, k: (k, 0)),     # M tiles
                pl.BlockSpec((fin, fout), lambda i, k: (0, 0)),   # W resident
                pl.BlockSpec((1, fout), lambda i, k: (0, 0)),     # b resident
            ],
            out_specs=pl.BlockSpec((tm, fout), lambda i, k: (i, 0)),
            scratch_shapes=[pltpu.VMEM((tm, fin), jnp.float32)],
            compiler_params=pltpu.CompilerParams(
                dimension_semantics=("parallel", "arbitrary"),
                vmem_limit_bytes=vmem_limit),
        )(a_bf16, m_bf16, w_bf16, b_f32)

    # fout < fin: transform first (narrow the features), then propagate + bias.
    t = pl.pallas_call(
        _transform_kernel,
        out_shape=jax.ShapeDtypeStruct((n_pad, fout), jnp.bfloat16),
        grid=(n_pad // tm,),
        in_specs=[
            pl.BlockSpec((tm, fin), lambda i: (i, 0)),
            pl.BlockSpec((fin, fout), lambda i: (0, 0)),
        ],
        out_specs=pl.BlockSpec((tm, fout), lambda i: (i, 0)),
        compiler_params=pltpu.CompilerParams(
            dimension_semantics=("parallel",),
            vmem_limit_bytes=vmem_limit),
    )(m_bf16, w_bf16)

    return pl.pallas_call(
        _make_propagate_kernel(fuse_weight=False, apply_relu=relu),
        out_shape=jax.ShapeDtypeStruct((n_pad, fout), out_dtype),
        grid=grid2,
        in_specs=[
            pl.BlockSpec((tm, tk), lambda i, k: (i, k)),
            pl.BlockSpec((tk, fout), lambda i, k: (k, 0)),
            pl.BlockSpec((1, fout), lambda i, k: (0, 0)),
        ],
        out_specs=pl.BlockSpec((tm, fout), lambda i, k: (i, 0)),
        scratch_shapes=[pltpu.VMEM((tm, fout), jnp.float32)],
        compiler_params=pltpu.CompilerParams(
            dimension_semantics=("parallel", "arbitrary"),
            vmem_limit_bytes=vmem_limit),
    )(a_bf16, t, b_f32)


# ----------------------------------------------------------------------------- plain-JAX glue
def gcn_normalized_adjacency(edge_index, num_nodes):
    """Dense A_hat = D^{-1/2} (A + I) D^{-1/2}; A[dst, src] = 1. Built in f32."""
    # TODO(synk): for large sparse graphs, replace the dense A_hat matmul with a
    # CSR/edge-list gather + segment-sum propagation kernel (PrefetchScalarGridSpec).
    src, dst = edge_index[0], edge_index[1]
    adj = jnp.zeros((num_nodes, num_nodes), jnp.float32)
    adj = adj.at[dst, src].add(1.0)
    adj = adj + jnp.eye(num_nodes, dtype=jnp.float32)     # self loops
    deg = jnp.sum(adj, axis=1)
    dinv = jnp.where(deg > 0, 1.0 / jnp.sqrt(deg), 0.0)
    return dinv[:, None] * adj * dinv[None, :]


def gnn_retriever_forward(x, edge_index, params, *, tile=256):
    """x: [N, input_dim] f32; edge_index: [2, E] int32.

    `tile`: A_hat tile edge; use 256 on v6e/v7x (2x256^2 MXU), 128 on v5e.
    """
    assert tile % 128 == 0
    n, fin = x.shape
    w1, b1, w2, b2 = params["w1"], params["b1"], params["w2"], params["b2"]
    hid, fout = w1.shape[1], w2.shape[1]

    # Normalization computed in f32; bf16 cast is the very last step.
    a_hat = gcn_normalized_adjacency(edge_index, n)

    # MXU-/lane-friendly padded shapes.
    if n <= tile:
        n_pad = _round_up(n, 8)
        tm = tk = n_pad
    else:
        n_pad = _round_up(n, tile)
        tm = tk = tile
    fin_p, hid_p, fout_p = (_round_up(d, 128) for d in (fin, hid, fout))

    a_p = _pad2d(a_hat, n_pad, n_pad).astype(jnp.bfloat16)
    x_p = _pad2d(x, n_pad, fin_p).astype(jnp.bfloat16)
    w1_p = _pad2d(w1, fin_p, hid_p).astype(jnp.bfloat16)
    w2_p = _pad2d(w2, hid_p, fout_p).astype(jnp.bfloat16)
    b1_p = _pad2d(b1.reshape(1, -1), 1, hid_p).astype(jnp.float32)
    b2_p = _pad2d(b2.reshape(1, -1), 1, fout_p).astype(jnp.float32)

    vmem_limit = _vmem_limit_bytes(tm, tk, max(fin_p, hid_p, fout_p))

    # Layer 1: relu(A_hat @ X @ W1 + b1)   (kept in bf16 for the next MXU pass)
    h = _gcn_layer(a_p, x_p, w1_p, b1_p, relu=True, out_dtype=jnp.bfloat16,
                   tm=tm, tk=tk, vmem_limit=vmem_limit)
    # Layer 2: A_hat @ H @ W2 + b2
    out = _gcn_layer(a_p, h, w2_p, b2_p, relu=False, out_dtype=jnp.float32,
                     tm=tm, tk=tk, vmem_limit=vmem_limit)
    return out[:n, :fout]


def init_params(key, input_dim, hidden_dim, output_dim):
    """Glorot-style init; weights stored as [in, out] (== torch W^T)."""
    k1, k2, k3, k4 = jax.random.split(key, 4)

    def glorot(k, fan_in, fan_out):
        lim = jnp.sqrt(6.0 / (fan_in + fan_out))
        return jax.random.uniform(k, (fan_in, fan_out), jnp.float32, -lim, lim)

    # GCNConv default bias init is zeros; small random biases used here so the
    # bias-add path is actually exercised numerically.
    return {
        "w1": glorot(k1, input_dim, hidden_dim),
        "b1": 0.01 * jax.random.normal(k3, (hidden_dim,), jnp.float32),
        "w2": glorot(k2, hidden_dim, output_dim),
        "b2": 0.01 * jax.random.normal(k4, (output_dim,), jnp.float32),
    }


def _reference(x, a_hat, params):
    h = jnp.maximum(a_hat @ (x @ params["w1"]) + params["b1"][None, :], 0.0)
    return a_hat @ (h @ params["w2"]) + params["b2"][None, :]


if __name__ == "__main__":
    key = jax.random.PRNGKey(0)
    # TODO(synk): gnn_type='gat' (GATConv attention) branch not implemented; gcn only.
    n_nodes, input_dim, hidden_dim, output_dim, n_edges = 256, 64, 256, 16, 1024

    kx, ke, kp = jax.random.split(key, 3)
    x = jax.random.normal(kx, (n_nodes, input_dim), jnp.float32)
    src = jax.random.randint(ke, (n_edges,), 0, n_nodes)
    dst = jax.random.randint(jax.random.fold_in(ke, 1), (n_edges,), 0, n_nodes)
    edge_index = jnp.stack([src, dst]).astype(jnp.int32)

    params = init_params(kp, input_dim, hidden_dim, output_dim)

    # tile=128 works on every generation (v5e MXU native); use 256 on v6e/v7x.
    out = gnn_retriever_forward(x, edge_index, params, tile=128)
    jax.block_until_ready(out)
    assert out.shape == (n_nodes, output_dim)

    ref = _reference(x, gcn_normalized_adjacency(edge_index, n_nodes), params)
    err = float(jnp.max(jnp.abs(out - ref)))
    assert jnp.isfinite(err) and err < 1e-1, f"max abs err {err}"
    print("KERNEL_OK")
</pallas_src>

<mosaic_0001>
module attributes {stable_mosaic.version = 11 : i64} {
  func.func @kernel(%arg0: i32, %arg1: i32, %arg2: memref<128x128xbf16, #tpu.memory_space<vmem>>, %arg3: memref<128x128xbf16, #tpu.memory_space<vmem>>, %arg4: memref<128x256xbf16, #tpu.memory_space<vmem>>, %arg5: memref<1x256xf32, #tpu.memory_space<vmem>>, %arg6: memref<128x256xbf16, #tpu.memory_space<vmem>>, %arg7: memref<128x128xf32, #tpu.memory_space<vmem>>) attributes {dimension_semantics = [#tpu.dimension_semantics<parallel>, #tpu.dimension_semantics<arbitrary>], iteration_bounds = array<i64: 2, 2>, scalar_prefetch = 0 : i64, scratch_operands = 1 : i64, tpu.core_type = #tpu.core_type<tc>, window_params = [{transform_indices = @transform_0, window_bounds = array<i64: 128, 128>}, {transform_indices = @transform_1, window_bounds = array<i64: 128, 128>}, {pipeline_mode = #tpu.pipeline_mode<synchronous>, transform_indices = @transform_2, window_bounds = array<i64: 128, 256>}, {pipeline_mode = #tpu.pipeline_mode<synchronous>, transform_indices = @transform_3, window_bounds = array<i64: 1, 256>}, {transform_indices = @transform_4, window_bounds = array<i64: 128, 256>}]} {
    %c0_i32 = arith.constant 0 : i32
    %0 = arith.cmpi eq, %arg1, %c0_i32 : i32
    %1 = arith.extui %0 : i1 to i32
    %c0_i32_0 = arith.constant 0 : i32
    %2 = arith.cmpi ne, %1, %c0_i32_0 : i32
    scf.if %2 {
      %cst_9 = arith.constant 0.000000e+00 : f32
      %12 = vector.broadcast %cst_9 : f32 to vector<128x128xf32>
      %c0_10 = arith.constant 0 : index
      %c0_11 = arith.constant 0 : index
      %13 = vector.load %arg7[%c0_10, %c0_11] : memref<128x128xf32, #tpu.memory_space<vmem>>, vector<128x128xf32>
      tpu.vector_store %arg7[%c0_10, %c0_11], %12 {strides = array<i32>} : memref<128x128xf32, #tpu.memory_space<vmem>>, vector<128x128xf32>,
    } else {
    }
    %c0 = arith.constant 0 : index
    %c0_1 = arith.constant 0 : index
    %3 = vector.load %arg7[%c0, %c0_1] : memref<128x128xf32, #tpu.memory_space<vmem>>, vector<128x128xf32>
    %c0_2 = arith.constant 0 : index
    %c0_3 = arith.constant 0 : index
    %4 = vector.load %arg2[%c0_2, %c0_3] : memref<128x128xbf16, #tpu.memory_space<vmem>>, vector<128x128xbf16>
    %c0_4 = arith.constant 0 : index
    %c0_5 = arith.constant 0 : index
    %5 = vector.load %arg3[%c0_4, %c0_5] : memref<128x128xbf16, #tpu.memory_space<vmem>>, vector<128x128xbf16>
    %cst = arith.constant dense<0.000000e+00> : vector<128x128xf32>
    %6 = tpu.matmul %4, %5, %cst {dimension_numbers = #tpu.dot_dimension_numbers<[1], [0], [0], [1], [0, 0, 1, 1], [], []>} : vector<128x128xbf16>, vector<128x128xbf16>, vector<128x128xf32> -> vector<128x128xf32>
    %7 = arith.addf %3, %6 : vector<128x128xf32>
    %c0_6 = arith.constant 0 : index
    %c0_7 = arith.constant 0 : index
    %8 = vector.load %arg7[%c0_6, %c0_7] : memref<128x128xf32, #tpu.memory_space<vmem>>, vector<128x128xf32>
    tpu.vector_store %arg7[%c0_6, %c0_7], %7 {strides = array<i32>} : memref<128x128xf32, #tpu.memory_space<vmem>>, vector<128x128xf32>,
    %c1_i32 = arith.constant 1 : i32
    %9 = arith.cmpi eq, %arg1, %c1_i32 : i32
    %10 = arith.extui %9 : i1 to i32
    %c0_i32_8 = arith.constant 0 : i32
    %11 = arith.cmpi ne, %10, %c0_i32_8 : i32
    scf.if %11 {
      %c0_9 = arith.constant 0 : index
      %c0_10 = arith.constant 0 : index
      %12 = vector.load %arg7[%c0_9, %c0_10] : memref<128x128xf32, #tpu.memory_space<vmem>>, vector<128x128xf32>
      %13 = arith.truncf %12 : vector<128x128xf32> to vector<128x128xbf16>
      %c0_11 = arith.constant 0 : index
      %c0_12 = arith.constant 0 : index
      %14 = vector.load %arg4[%c0_11, %c0_12] : memref<128x256xbf16, #tpu.memory_space<vmem>>, vector<128x256xbf16>
      %cst_13 = arith.constant dense<0.000000e+00> : vector<128x256xf32>
      %15 = tpu.matmul %13, %14, %cst_13 {dimension_numbers = #tpu.dot_dimension_numbers<[1], [0], [0], [1], [0, 0, 1, 1], [], []>} : vector<128x128xbf16>, vector<128x256xbf16>, vector<128x256xf32> -> vector<128x256xf32>
      %c0_14 = arith.constant 0 : index
      %c0_15 = arith.constant 0 : index
      %16 = vector.load %arg5[%c0_14, %c0_15] : memref<1x256xf32, #tpu.memory_space<vmem>>, vector<1x256xf32>
      %17 = vector.broadcast %16 : vector<1x256xf32> to vector<128x256xf32>
      %18 = arith.addf %15, %17 : vector<128x256xf32>
      %cst_16 = arith.constant 0.000000e+00 : f32
      %19 = vector.broadcast %cst_16 : f32 to vector<128x256xf32>
      %20 = arith.maximumf %18, %19 : vector<128x256xf32>
      %21 = arith.truncf %20 : vector<128x256xf32> to vector<128x256xbf16>
      %c0_17 = arith.constant 0 : index
      %c0_18 = arith.constant 0 : index
      %22 = vector.load %arg6[%c0_17, %c0_18] : memref<128x256xbf16, #tpu.memory_space<vmem>>, vector<128x256xbf16>
      tpu.vector_store %arg6[%c0_17, %c0_18], %21 {strides = array<i32>} : memref<128x256xbf16, #tpu.memory_space<vmem>>, vector<128x256xbf16>,
    } else {
    }
    return
  }
  func.func @transform_0(%arg0: i32, %arg1: i32) -> (i32, i32) {
    %c0_i32 = arith.constant 0 : i32
    return %arg0, %arg1 : i32, i32
  }
  func.func @transform_1(%arg0: i32, %arg1: i32) -> (i32, i32) {
    %c0_i32 = arith.constant 0 : i32
    %c0_i32_0 = arith.constant 0 : i32
    return %arg1, %c0_i32 : i32, i32
  }
  func.func @transform_2(%arg0: i32, %arg1: i32) -> (i32, i32) {
    %c0_i32 = arith.constant 0 : i32
    %c0_i32_0 = arith.constant 0 : i32
    %c0_i32_1 = arith.constant 0 : i32
    return %c0_i32, %c0_i32_0 : i32, i32
  }
  func.func @transform_3(%arg0: i32, %arg1: i32) -> (i32, i32) {
    %c0_i32 = arith.constant 0 : i32
    %c0_i32_0 = arith.constant 0 : i32
    %c0_i32_1 = arith.constant 0 : i32
    return %c0_i32, %c0_i32_0 : i32, i32
  }
  func.func @transform_4(%arg0: i32, %arg1: i32) -> (i32, i32) {
    %c0_i32 = arith.constant 0 : i32
    %c0_i32_0 = arith.constant 0 : i32
    return %arg0, %c0_i32 : i32, i32
  }
}

</mosaic_0001>

<llo_original>
// kernel: tpu_custom_call.1
$region0: #{tpu_custom_call.1}
  #allocation0 [shape = 'u32[]', space=smem, size = 0x4, offset = 0x4, fixed_abs, tag = 'smem constant byte address 0x4 - core index']
  #allocation1 [shape = 'u32[144,128]{1,0:T(1,128)}', space=vmem, size = 0x12000, scoped, tag = 'internal scratch']
  #allocation2 [shape = 'f32[128,128]{1,0:T(8,128)}', space=vmem, size = 0x10000, scoped, tag = 'scratch operand']
  %s0 = inlined_call_operand.hbm [shape: bf16[256,256], index: 0, kind: input, shape index: {}]
  %s1 = inlined_call_operand.hbm [shape: bf16[256,128], index: 1, kind: input, shape index: {}]
  %s2 = inlined_call_operand.hbm [shape: bf16[128,256], index: 2, kind: input, shape index: {}]
  %s3 = inlined_call_operand.vmem [shape: f32[1,256], index: 3, kind: input, shape index: {}]
  %s4 = inlined_call_operand.hbm [shape: bf16[256,256], index: 4, kind: output, shape index: {}]
  %s5 = sld [smem:[#allocation0]]
  $region69: #{tpu_custom_call.1} parent=0
    _
  %s7 = ssub.s32 1, %s5
  %s8 = scalar_select 0, %s7, %s5
  $region1: #{tpu_custom_call.1} parent=0
    #allocation3 [shape = 'u8[65536]{0}', space=vmem, size = 0x10000, scoped, tag = 'input window, operand 0']
    #allocation4 [shape = 's32[2]{0}', space=sflag, size = 0x8, scoped, tag = 'scoped memory for tpu_custom_call.1']
    #allocation5 [shape = 's32[2]{0}', space=sflag, size = 0x8, scoped, tag = 'scoped memory for tpu_custom_call.1']
    #allocation6 [shape = 'u8[65536]{0}', space=vmem, size = 0x10000, scoped, tag = 'input window, operand 1']
    #allocation7 [shape = 's32[2]{0}', space=sflag, size = 0x8, scoped, tag = 'scoped memory for tpu_custom_call.1']
    #allocation8 [shape = 'u8[65536]{0}', space=vmem, size = 0x10000, scoped, tag = 'input window, operand 2, single buffered']
    #allocation9 [shape = 'u8[131072]{0}', space=vmem, size = 0x20000, scoped, tag = 'output window, operand 0']
    %9 = vsyncpa [#allocation4], 0
    %s10 = scalar_lea.sflag [#allocation4], 1
    %11 = vsyncpa %s10, 0
    %12 = vsyncpa [#allocation7], 0
    %s13 = scalar_lea.sflag [#allocation7], 1
    %14 = vsyncpa %s13, 0
    %15 = vsyncpa [#allocation5], 0
    %s16 = scalar_lea.sflag [#allocation5], 1
    %17 = vsyncpa %s16, 0
    loop: start=0, step=1, limit=6
    $region2: #{tpu_custom_call.1} parent=1 // loop_pre_header
      _
    $region3: #{tpu_custom_call.1} parent=1 // loop_header
      %s19 = sphi 0, %s23
      %p20 = scmp.ge.s32.totalorder %s19, 6
      %s26 = sphi 0, %s38
      %s27 = sphi 0, %s34
      %s28 = sphi 0, %s26
      %s29 = sphi 0, %s27
      %s30 = sphi 0, %s28
      %s31 = sphi 0, %s29
      %s43 = sphi 0, %s45
      %s46 = sphi 0, %s43
      %s47 = sphi 0, %s46
      %s63 = sphi 0, %s47
      %s69 = sphi 0, %s71
      %s72 = sphi 0, %s69
      %s73 = sphi 0, %s72
      %s89 = sphi 0, %s73
      %s93 = sphi 0, %s93
      %s95 = sphi 0, %s93
      %s96 = sphi 0, %s95
      %s110 = sphi 0, %s96
      %s114 = sphi 0, %s114
      %s116 = sphi 0, %s114
      %s117 = sphi 0, %s116
      %s131 = sphi 0, %s117
      %s137 = sphi 0, %s139
      %s140 = sphi 0, %s137
      %s141 = sphi 0, %s140
      %s157 = sphi 0, %s141
    $region4: #{tpu_custom_call.1} parent=1 // loop_header_branch
      %22 = sbr.rel (%p20) target = $region8
    $region5: #{tpu_custom_call.1} parent=1 // loop_body
      %s24 = ssub.s32 %s19, 1
      %s25 = ssub.s32 %s19, 2
      %s32 = sadd.s32 1, %s27
      %p33 = scmp.ge.s32.totalorder %s32, 2
      %s34 = scalar_select %p33, 0, %s32
      %s35 = sadd.s32 1, %s26
      %s36 = scalar_select %p33, %s35, %s26
      %p37 = scmp.ge.s32.totalorder %s36, 2
      %s38 = scalar_select %p37, 0, %s36
      %s39 = ssub.s32 %s26, %s38
      %s40 = ssub.s32 %s27, %s34
      %s41 = sor.u32 %s39, %s40
      %p42 = scmp.eq.s32.totalorder %s41, 0
      %s44 = sadd.s32 %s43, 1
      %s45 = scalar_select %p42, %s43, %s44
      %p48 = pneg %p42
      %p49 = scmp.eq.s32.totalorder %s19, 3
      %p50 = por %p48, %p49
      %p51 = scmp.ne.s32.totalorder %s43, %s46
      %p52 = scmp.eq.s32.totalorder %s19, 0
      %p53 = por %p51, %p52
      %p54 = scmp.ne.s32.totalorder %s43, %s46
      %p55 = scmp.eq.s32.totalorder %s24, 3
      %p56 = por %p54, %p55
      %p57 = scmp.ne.s32.totalorder %s46, %s47
      %p58 = scmp.eq.s32.totalorder %s24, 0
      %p59 = por %p57, %p58
      %p60 = scmp.ne.s32.totalorder %s46, %s47
      %p61 = scmp.eq.s32.totalorder %s25, 3
      %p62 = por %p60, %p61
      %p64 = scmp.ne.s32.totalorder %s47, %s63
      %p65 = scmp.eq.s32.totalorder %s25, 0
      %p66 = por %p64, %p65
      %s67 = ssub.s32 %s27, %s34
      %p68 = scmp.eq.s32.totalorder %s67, 0
      %s70 = sadd.s32 %s69, 1
      %s71 = scalar_select %p68, %s69, %s70
      %p74 = pneg %p68
      %p75 = scmp.eq.s32.totalorder %s19, 3
      %p76 = por %p74, %p75
      %p77 = scmp.ne.s32.totalorder %s69, %s72
      %p78 = scmp.eq.s32.totalorder %s19, 0
      %p79 = por %p77, %p78
      %p80 = scmp.ne.s32.totalorder %s69, %s72
      %p81 = scmp.eq.s32.totalorder %s24, 3
      %p82 = por %p80, %p81
      %p83 = scmp.ne.s32.totalorder %s72, %s73
      %p84 = scmp.eq.s32.totalorder %s24, 0
      %p85 = por %p83, %p84
      %p86 = scmp.ne.s32.totalorder %s72, %s73
      %p87 = scmp.eq.s32.totalorder %s25, 3
      %p88 = por %p86, %p87
      %p90 = scmp.ne.s32.totalorder %s73, %s89
      %p91 = scmp.eq.s32.totalorder %s25, 0
      %p92 = por %p90, %p91
      %s94 = sadd.s32 %s93, 1
      %p97 = scmp.eq.s32.totalorder %s19, 3
      %p98 = scmp.ne.s32.totalorder %s93, %s95
      %p99 = scmp.eq.s32.totalorder %s19, 0
      %p100 = por %p98, %p99
      %p101 = scmp.ne.s32.totalorder %s93, %s95
      %p102 = scmp.eq.s32.totalorder %s24, 3
      %p103 = por %p101, %p102
      %p104 = scmp.ne.s32.totalorder %s95, %s96
      %p105 = scmp.eq.s32.totalorder %s24, 0
      %p106 = por %p104, %p105
      %p107 = scmp.ne.s32.totalorder %s95, %s96
      %p108 = scmp.eq.s32.totalorder %s25, 3
      %p109 = por %p107, %p108
      %p111 = scmp.ne.s32.totalorder %s96, %s110
      %p112 = scmp.eq.s32.totalorder %s25, 0
      %p113 = por %p111, %p112
      %s115 = sadd.s32 %s114, 1
      %p118 = scmp.eq.s32.totalorder %s19, 3
      %p119 = scmp.ne.s32.totalorder %s114, %s116
      %p120 = scmp.eq.s32.totalorder %s19, 0
      %p121 = por %p119, %p120
      %p122 = scmp.ne.s32.totalorder %s114, %s116
      %p123 = scmp.eq.s32.totalorder %s24, 3
      %p124 = por %p122, %p123
      %p125 = scmp.ne.s32.totalorder %s116, %s117
      %p126 = scmp.eq.s32.totalorder %s24, 0
      %p127 = por %p125, %p126
      %p128 = scmp.ne.s32.totalorder %s116, %s117
      %p129 = scmp.eq.s32.totalorder %s25, 3
      %p130 = por %p128, %p129
      %p132 = scmp.ne.s32.totalorder %s117, %s131
      %p133 = scmp.eq.s32.totalorder %s25, 0
      %p134 = por %p132, %p133
      %s135 = ssub.s32 %s26, %s38
      %p136 = scmp.eq.s32.totalorder %s135, 0
      %s138 = sadd.s32 %s137, 1
      %s139 = scalar_select %p136, %s137, %s138
      %p142 = pneg %p136
      %p143 = scmp.eq.s32.totalorder %s19, 3
      %p144 = por %p142, %p143
      %p145 = scmp.ne.s32.totalorder %s137, %s140
      %p146 = scmp.eq.s32.totalorder %s19, 0
      %p147 = por %p145, %p146
      %p148 = scmp.ne.s32.totalorder %s137, %s140
      %p149 = scmp.eq.s32.totalorder %s24, 3
      %p150 = por %p148, %p149
      %p151 = scmp.ne.s32.totalorder %s140, %s141
      %p152 = scmp.eq.s32.totalorder %s24, 0
      %p153 = por %p151, %p152
      %p154 = scmp.ne.s32.totalorder %s140, %s141
      %p155 = scmp.eq.s32.totalorder %s25, 3
      %p156 = por %p154, %p155
      %p158 = scmp.ne.s32.totalorder %s141, %s157
      %p159 = scmp.eq.s32.totalorder %s25, 0
      %p160 = por %p158, %p159
      %p161 = scmp.le.s32.totalorder 1, %s19
      %p162 = scmp.lt.s32.totalorder %s19, 5
      %p163 = pnand %p161, %p162
      %p164 = pneg %p163
      // Predicated region
      $region9: #{tpu_custom_call.1} parent=5 // pred_check
        _
      $region10: #{tpu_custom_call.1} parent=5 // pred_check_branch
        %166 = sbr.rel (%p163) target = $region12
      $region11: #{tpu_custom_call.1} parent=5 // pred_region
        %s167 = ssub.s32 %s19, 1
        // Predicated region
        $region13: #{tpu_custom_call.1} parent=11 // pred_check
          %p168 = pneg %p106
        $region14: #{tpu_custom_call.1} parent=11 // pred_check_branch
          %170 = sbr.rel (%p168) target = $region16
        $region15: #{tpu_custom_call.1} parent=11 // pred_region
          %s172 = ssub.s32 2048, 2048
          %173 = vsyncadd [#allocation7], %s172
          %s174 = sshll.u32 [#allocation8], 4
          %s175 = int_to_ptr.vmem [resolvable:$true] %s174
          %180 = dma.hbm_to_vmem [thread:$0]  %s2, 2048, %s175, [#allocation7], 128, 128, 8
        $region16: #{tpu_custom_call.1} parent=11 // pred_fallthru
          _
        // Predicated region
        $region17: #{tpu_custom_call.1} parent=11 // pred_check
          %p181 = pneg %p127
        $region18: #{tpu_custom_call.1} parent=11 // pred_check_branch
          %183 = sbr.rel (%p181) target = $region20
        $region19: #{tpu_custom_call.1} parent=11 // pred_region
          _
        $region20: #{tpu_custom_call.1} parent=11 // pred_fallthru
          _
      $region12: #{tpu_custom_call.1} parent=5 // pred_fallthru
        _
      %p184 = scmp.lt.s32.totalorder %s19, 4
      // Predicated region
      $region21: #{tpu_custom_call.1} parent=5 // pred_check
        %p185 = pneg %p184
      $region22: #{tpu_custom_call.1} parent=5 // pred_check_branch
        %187 = sbr.rel (%p185) target = $region24
      $region23: #{tpu_custom_call.1} parent=5 // pred_region
        // Predicated region
        $region25: #{tpu_custom_call.1} parent=23 // pred_check
          %p188 = pneg %p53
        $region26: #{tpu_custom_call.1} parent=23 // pred_check_branch
          %190 = sbr.rel (%p188) target = $region28
        $region27: #{tpu_custom_call.1} parent=23 // pred_region
          %s191 = sand.u32 %s43, 1
          %s192 = scalar_lea.sflag [#allocation4], %s191
          %s193 = sand.u32 %s43, 1
          %s194 = smul.addr %s193, 64
          %s195 = scalar_lea.vmem [#allocation3], %s194
          %s196 = smul.u32 16, %s26
          %s198 = ssub.s32 1024, 1024
          %199 = vsyncadd %s192, %s198
          %s200 = smul.addr %s196, 2
          %s201 = sadd.s32 %s27, %s200
          %s202 = smul.addr %s201, 64
          %s203 = scalar_lea.hbm %s0, %s202
          %s204 = sshll.u32 %s195, 4
          %s205 = int_to_ptr.vmem [resolvable:$true] %s204
          %210 = dma.hbm_to_vmem [thread:$0]  %s203, 1024, %s205, %s192, 128, 64, 4
        $region28: #{tpu_custom_call.1} parent=23 // pred_fallthru
          _
        // Predicated region
        $region29: #{tpu_custom_call.1} parent=23 // pred_check
          %p211 = pneg %p79
        $region30: #{tpu_custom_call.1} parent=23 // pred_check_branch
          %213 = sbr.rel (%p211) target = $region32
        $region31: #{tpu_custom_call.1} parent=23 // pred_region
          %s214 = sand.u32 %s19, 1
          %s215 = scalar_lea.sflag [#allocation7], %s214
          %s216 = sand.u32 %s69, 1
          %s217 = smul.addr %s216, 64
          %s218 = scalar_lea.vmem [#allocation6], %s217
          %s219 = smul.u32 16, %s27
          %s221 = ssub.s32 1024, 1024
          %222 = vsyncadd %s215, %s221
          %s223 = smul.addr %s219, 64
          %s224 = scalar_lea.hbm %s1, %s223
          %s225 = sshll.u32 %s218, 4
          %s226 = int_to_ptr.vmem [resolvable:$true] %s225
          %231 = dma.hbm_to_vmem [thread:$0]  %s224, 1024, %s226, %s215, 64, 64, 4
        $region32: #{tpu_custom_call.1} parent=23 // pred_fallthru
          _
      $region24: #{tpu_custom_call.1} parent=5 // pred_fallthru
        _
      %p232 = scmp.le.s32.totalorder 1, %s19
      %p233 = scmp.lt.s32.totalorder %s19, 5
      %p234 = pnand %p232, %p233
      %p235 = pneg %p234
      // Predicated region
      $region33: #{tpu_custom_call.1} parent=5 // pred_check
        _
      $region34: #{tpu_custom_call.1} parent=5 // pred_check_branch
        %237 = sbr.rel (%p234) target = $region36
      $region35: #{tpu_custom_call.1} parent=5 // pred_region
        %s238 = ssub.s32 %s19, 1
        %s239 = sand.u32 %s46, 1
        %s240 = scalar_lea.sflag [#allocation4], %s239
        %s241 = sand.u32 %s46, 1
        %s242 = smul.addr %s241, 64
        %s243 = scalar_lea.vmem [#allocation3], %s242
        // Predicated region
        $region37: #{tpu_custom_call.1} parent=35 // pred_check
          %p244 = pneg %p59
        $region38: #{tpu_custom_call.1} parent=35 // pred_check_branch
          %246 = sbr.rel (%p244) target = $region40
        $region39: #{tpu_custom_call.1} parent=35 // pred_region
          %247 = dma.done %s240, 1024
        $region40: #{tpu_custom_call.1} parent=35 // pred_fallthru
          _
        %s248 = sand.u32 %s24, 1
        %s249 = scalar_lea.sflag [#allocation7], %s248
        %s250 = sand.u32 %s72, 1
        %s251 = smul.addr %s250, 64
        %s252 = scalar_lea.vmem [#allocation6], %s251
        // Predicated region
        $region41: #{tpu_custom_call.1} parent=35 // pred_check
          %p253 = pneg %p85
        $region42: #{tpu_custom_call.1} parent=35 // pred_check_branch
          %255 = sbr.rel (%p253) target = $region44
        $region43: #{tpu_custom_call.1} parent=35 // pred_region
          %256 = dma.done %s249, 1024
        $region44: #{tpu_custom_call.1} parent=35 // pred_fallthru
          _
        // Predicated region
        $region45: #{tpu_custom_call.1} parent=35 // pred_check
          %p257 = pneg %p106
        $region46: #{tpu_custom_call.1} parent=35 // pred_check_branch
          %259 = sbr.rel (%p257) target = $region48
        $region47: #{tpu_custom_call.1} parent=35 // pred_region
          %260 = dma.done [#allocation7], 2048
        $region48: #{tpu_custom_call.1} parent=35 // pred_fallthru
          _
        %s261 = sand.u32 %s46, 1
        %s262 = scalar_lea.sflag [#allocation4], %s261
        %s263 = sand.u32 %s46, 1
        %s264 = smul.addr %s263, 64
        %s265 = scalar_lea.vmem [#allocation3], %s264
        %p266 = pneg %p59
        %p267 = pneg %p56
        %s268 = sand.u32 %s24, 1
        %s269 = scalar_lea.sflag [#allocation7], %s268
        %s270 = sand.u32 %s72, 1
        %s271 = smul.addr %s270, 64
        %s272 = scalar_lea.vmem [#allocation6], %s271
        %p273 = pneg %p85
        %p274 = pneg %p82
        %p275 = pneg %p106
        %p276 = pneg %p103
        %p277 = pneg %p127
        %p278 = pneg %p124
        %p279 = pneg %p153
        %p280 = pneg %p150
        %s281 = sand.u32 %s140, 1
        %s282 = scalar_lea.sflag [#allocation5], %s281
        %s283 = sand.u32 %s140, 1
        %s284 = smul.addr %s283, 128
        %s285 = scalar_lea.vmem [#allocation9], %s284
        %s286 = smul.u32 16, %s28
        %s287 = smul.u32 16, %s29
        %s288 = smul.u32 16, %s28
        %p290 = scmp.eq.s32.totalorder %s29, 0
        // Predicated region
        $region49: #{tpu_custom_call.1} parent=35 // pred_check
          %p291 = pneg %p290
        $region50: #{tpu_custom_call.1} parent=35 // pred_check_branch
          %293 = sbr.rel (%p291) target = $region52
        $region51: #{tpu_custom_call.1} parent=35 // pred_region
          %294 = vst [vmem:[#allocation2] sm:$0xff] 0.0
          %295 = vst [vmem:[#allocation2 + $0x8] sm:$0xff] 0.0
          %296 = vst [vmem:[#allocation2 + $0x10] sm:$0xff] 0.0
          %297 = vst [vmem:[#allocation2 + $0x18] sm:$0xff] 0.0
          %298 = vst [vmem:[#allocation2 + $0x20] sm:$0xff] 0.0
          %299 = vst [vmem:[#allocation2 + $0x28] sm:$0xff] 0.0
          %300 = vst [vmem:[#allocation2 + $0x30] sm:$0xff] 0.0
          %301 = vst [vmem:[#allocation2 + $0x38] sm:$0xff] 0.0
          %302 = vst [vmem:[#allocation2 + $0x40] sm:$0xff] 0.0
          %303 = vst [vmem:[#allocation2 + $0x48] sm:$0xff] 0.0
          %304 = vst [vmem:[#allocation2 + $0x50] sm:$0xff] 0.0
          %305 = vst [vmem:[#allocation2 + $0x58] sm:$0xff] 0.0
          %306 = vst [vmem:[#allocation2 + $0x60] sm:$0xff] 0.0
          %307 = vst [vmem:[#allocation2 + $0x68] sm:$0xff] 0.0
          %308 = vst [vmem:[#allocation2 + $0x70] sm:$0xff] 0.0
          %309 = vst [vmem:[#allocation2 + $0x78] sm:$0xff] 0.0
        $region52: #{tpu_custom_call.1} parent=35 // pred_fallthru
          _
        %v310 = vld [vmem:[#allocation2] sm:$0xff]
        %v311 = vld [vmem:[#allocation2 + $0x8] sm:$0xff]
        %v312 = vld [vmem:[#allocation2 + $0x10] sm:$0xff]
        %v313 = vld [vmem:[#allocation2 + $0x18] sm:$0xff]
        %v314 = vld [vmem:[#allocation2 + $0x20] sm:$0xff]
        %v315 = vld [vmem:[#allocation2 + $0x28] sm:$0xff]
        %v316 = vld [vmem:[#allocation2 + $0x30] sm:$0xff]
        %v317 = vld [vmem:[#allocation2 + $0x38] sm:$0xff]
        %v318 = vld [vmem:[#allocation2 + $0x40] sm:$0xff]
        %v319 = vld [vmem:[#allocation2 + $0x48] sm:$0xff]
        %v320 = vld [vmem:[#allocation2 + $0x50] sm:$0xff]
        %v321 = vld [vmem:[#allocation2 + $0x58] sm:$0xff]
        %v322 = vld [vmem:[#allocation2 + $0x60] sm:$0xff]
        %v323 = vld [vmem:[#allocation2 + $0x68] sm:$0xff]
        %v324 = vld [vmem:[#allocation2 + $0x70] sm:$0xff]
        %v325 = vld [vmem:[#allocation2 + $0x78] sm:$0xff]
        %v326 = vld [vmem:[%s243] sm:$0xf]
        %v327 = vld [vmem:[%s243 + $0x4] sm:$0xf]
        %v328 = vld [vmem:[%s243 + $0x8] sm:$0xf]
        %v329 = vld [vmem:[%s243 + $0xc] sm:$0xf]
        %v330 = vld [vmem:[%s243 + $0x10] sm:$0xf]
        %v331 = vld [vmem:[%s243 + $0x14] sm:$0xf]
        %v332 = vld [vmem:[%s243 + $0x18] sm:$0xf]
        %v333 = vld [vmem:[%s243 + $0x1c] sm:$0xf]
        %v334 = vld [vmem:[%s243 + $0x20] sm:$0xf]
        %v335 = vld [vmem:[%s243 + $0x24] sm:$0xf]
        %v336 = vld [vmem:[%s243 + $0x28] sm:$0xf]
        %v337 = vld [vmem:[%s243 + $0x2c] sm:$0xf]
        %v338 = vld [vmem:[%s243 + $0x30] sm:$0xf]
        %v339 = vld [vmem:[%s243 + $0x34] sm:$0xf]
        %v340 = vld [vmem:[%s243 + $0x38] sm:$0xf]
        %v341 = vld [vmem:[%s243 + $0x3c] sm:$0xf]
        %v342 = vld [vmem:[%s252] sm:$0xf]
        %v343 = vld [vmem:[%s252 + $0x4] sm:$0xf]
        %v344 = vld [vmem:[%s252 + $0x8] sm:$0xf]
        %v345 = vld [vmem:[%s252 + $0xc] sm:$0xf]
        %v346 = vld [vmem:[%s252 + $0x10] sm:$0xf]
        %v347 = vld [vmem:[%s252 + $0x14] sm:$0xf]
        %v348 = vld [vmem:[%s252 + $0x18] sm:$0xf]
        %v349 = vld [vmem:[%s252 + $0x1c] sm:$0xf]
        %v350 = vld [vmem:[%s252 + $0x20] sm:$0xf]
        %v351 = vld [vmem:[%s252 + $0x24] sm:$0xf]
        %v352 = vld [vmem:[%s252 + $0x28] sm:$0xf]
        %v353 = vld [vmem:[%s252 + $0x2c] sm:$0xf]
        %v354 = vld [vmem:[%s252 + $0x30] sm:$0xf]
        %v355 = vld [vmem:[%s252 + $0x34] sm:$0xf]
        %v356 = vld [vmem:[%s252 + $0x38] sm:$0xf]
        %v357 = vld [vmem:[%s252 + $0x3c] sm:$0xf]
        %v374 = vunpack.c.l.b16 %v326
        %v375 = vunpack.c.l.b16 %v327
        %v376 = vunpack.c.l.b16 %v328
        %v377 = vunpack.c.l.b16 %v329
        %v378 = vunpack.c.l.b16 %v330
        %v379 = vunpack.c.l.b16 %v331
        %v380 = vunpack.c.l.b16 %v332
        %v381 = vunpack.c.l.b16 %v333
        %v382 = vunpack.c.l.b16 %v334
        %v383 = vunpack.c.l.b16 %v335
        %v384 = vunpack.c.l.b16 %v336
        %v385 = vunpack.c.l.b16 %v337
        %v386 = vunpack.c.l.b16 %v338
        %v387 = vunpack.c.l.b16 %v339
        %v388 = vunpack.c.l.b16 %v340
        %v389 = vunpack.c.l.b16 %v341
        %v390 = vpack.c.b16 %v375, %v374
        %v391 = vpack.c.b16 %v377, %v376
        %v392 = vpack.c.b16 %v379, %v378
        %v393 = vpack.c.b16 %v381, %v380
        %v394 = vpack.c.b16 %v383, %v382
        %v395 = vpack.c.b16 %v385, %v384
        %v396 = vpack.c.b16 %v387, %v386
        %v397 = vpack.c.b16 %v389, %v388
        %v422 = vunpack.c.l.b16 %v342
        %v423 = vunpack.c.l.b16 %v343
        %v424 = vunpack.c.l.b16 %v344
        %v425 = vunpack.c.l.b16 %v345
        %v426 = vunpack.c.l.b16 %v346
        %v427 = vunpack.c.l.b16 %v347
        %v428 = vunpack.c.l.b16 %v348
        %v429 = vunpack.c.l.b16 %v349
        %v430 = vunpack.c.l.b16 %v350
        %v431 = vunpack.c.l.b16 %v351
        %v432 = vunpack.c.l.b16 %v352
        %v433 = vunpack.c.l.b16 %v353
        %v434 = vunpack.c.l.b16 %v354
        %v435 = vunpack.c.l.b16 %v355
        %v436 = vunpack.c.l.b16 %v356
        %v437 = vunpack.c.l.b16 %v357
        %v438 = vpack.c.b16 %v423, %v422
        %v439 = vpack.c.b16 %v425, %v424
        %v440 = vpack.c.b16 %v427, %v426
        %v441 = vpack.c.b16 %v429, %v428
        %v442 = vpack.c.b16 %v431, %v430
        %v443 = vpack.c.b16 %v433, %v432
        %v444 = vpack.c.b16 %v435, %v434
        %v445 = vpack.c.b16 %v437, %v436
        %454 = vmatprep.subr.bf16.mxu0 0
        %455 = vmatpush1.bf16.msra.mxu0 %v438
        %456 = vmatprep.subr.bf16.mxu0 0
        %457 = vmatpush1.bf16.msra.mxu0 %v439
        %458 = vmatprep.subr.bf16.mxu0 0
        %459 = vmatpush1.bf16.msra.mxu0 %v440
        %460 = vmatprep.subr.bf16.mxu0 0
        %461 = vmatpush1.bf16.msra.mxu0 %v441
        %462 = vmatprep.subr.bf16.mxu0 0
        %463 = vmatpush1.bf16.msra.mxu0 %v442
        %464 = vmatprep.subr.bf16.mxu0 0
        %465 = vmatpush1.bf16.msra.mxu0 %v443
        %466 = vmatprep.subr.bf16.mxu0 0
        %467 = vmatpush1.bf16.msra.mxu0 %v444
        %468 = vmatprep.subr.bf16.mxu0 0
        %469 = vmatpush1.bf16.msra.mxu0 %v445
        %470 = vmatprep.subr.bf16.mxu0 0
        %471 = vmatpush1.bf16.msra.mxu0 0
        %472 = vmatprep.subr.bf16.mxu0 0
        %473 = vmatpush1.bf16.msra.mxu0 0
        %474 = vmatprep.subr.bf16.mxu0 0
        %475 = vmatpush1.bf16.msra.mxu0 0
        %476 = vmatprep.subr.bf16.mxu0 0
        %477 = vmatpush1.bf16.msra.mxu0 0
        %478 = vmatprep.subr.bf16.mxu0 0
        %479 = vmatpush1.bf16.msra.mxu0 0
        %480 = vmatprep.subr.bf16.mxu0 0
        %481 = vmatpush1.bf16.msra.mxu0 0
        %482 = vmatprep.subr.bf16.mxu0 0
        %483 = vmatpush1.bf16.msra.mxu0 0
        %484 = vmatprep.subr.bf16.mxu0 0
        %485 = vmatpush1.bf16.msra.mxu0 0
        %486 = vmatprep.mubr.bf16.mxu0 0
        %487 = vmatmul.mubr.bf16.gmra.mrb[0].mxu0 %v390
        %v488 = vpop.f32.mrb[0].mxu0
        %v489 = vadd.f32 0.0, %v488
        %v490 = vpop.f32.mrb[0].mxu0
        %v491 = vpop.f32.mrb[0].mxu0
        %v492 = vadd.f32 0.0, %v491
        %v493 = vpop.f32.mrb[0].mxu0
        %494 = vmatprep.mubr.bf16.mxu0 0
        %495 = vmatmul.mubr.bf16.gmra.mrb[0].mxu0 %v391
        %v496 = vpop.f32.mrb[0].mxu0
        %v497 = vadd.f32 0.0, %v496
        %v498 = vpop.f32.mrb[0].mxu0
        %v499 = vpop.f32.mrb[0].mxu0
        %v500 = vadd.f32 0.0, %v499
        %v501 = vpop.f32.mrb[0].mxu0
        %502 = vmatprep.mubr.bf16.mxu0 0
        %503 = vmatmul.mubr.bf16.gmra.mrb[0].mxu0 %v392
        %v504 = vpop.f32.mrb[0].mxu0
        %v505 = vadd.f32 0.0, %v504
        %v506 = vpop.f32.mrb[0].mxu0
        %v507 = vpop.f32.mrb[0].mxu0
        %v508 = vadd.f32 0.0, %v507
        %v509 = vpop.f32.mrb[0].mxu0
        %510 = vmatprep.mubr.bf16.mxu0 0
        %511 = vmatmul.mubr.bf16.gmra.mrb[0].mxu0 %v393
        %v512 = vpop.f32.mrb[0].mxu0
        %v513 = vadd.f32 0.0, %v512
        %v514 = vpop.f32.mrb[0].mxu0
        %v515 = vpop.f32.mrb[0].mxu0
        %v516 = vadd.f32 0.0, %v515
        %v517 = vpop.f32.mrb[0].mxu0
        %518 = vmatprep.mubr.bf16.mxu0 0
        %519 = vmatmul.mubr.bf16.gmra.mrb[0].mxu0 %v394
        %v520 = vpop.f32.mrb[0].mxu0
        %v521 = vadd.f32 0.0, %v520
        %v522 = vpop.f32.mrb[0].mxu0
        %v523 = vpop.f32.mrb[0].mxu0
        %v524 = vadd.f32 0.0, %v523
        %v525 = vpop.f32.mrb[0].mxu0
        %526 = vmatprep.mubr.bf16.mxu0 0
        %527 = vmatmul.mubr.bf16.gmra.mrb[0].mxu0 %v395
        %v528 = vpop.f32.mrb[0].mxu0
        %v529 = vadd.f32 0.0, %v528
        %v530 = vpop.f32.mrb[0].mxu0
        %v531 = vpop.f32.mrb[0].mxu0
        %v532 = vadd.f32 0.0, %v531
        %v533 = vpop.f32.mrb[0].mxu0
        %534 = vmatprep.mubr.bf16.mxu0 0
        %535 = vmatmul.mubr.bf16.gmra.mrb[0].mxu0 %v396
        %v536 = vpop.f32.mrb[0].mxu0
        %v537 = vadd.f32 0.0, %v536
        %v538 = vpop.f32.mrb[0].mxu0
        %v539 = vpop.f32.mrb[0].mxu0
        %v540 = vadd.f32 0.0, %v539
        %v541 = vpop.f32.mrb[0].mxu0
        %542 = vmatprep.mubr.bf16.mxu0 0
        %543 = vmatmul.mubr.bf16.gmra.mrb[0].mxu0 %v397
        %v544 = vpop.f32.mrb[0].mxu0
        %v545 = vadd.f32 0.0, %v544
        %v546 = vpop.f32.mrb[0].mxu0
        %v547 = vpop.f32.mrb[0].mxu0
        %v548 = vadd.f32 0.0, %v547
        %v549 = vpop.f32.mrb[0].mxu0
        %550 = vdwg.mxu0
        %v551 = vadd.f32 %v310, %v489
        %v552 = vadd.f32 %v311, %v492
        %v553 = vadd.f32 %v312, %v497
        %v554 = vadd.f32 %v313, %v500
        %v555 = vadd.f32 %v314, %v505
        %v556 = vadd.f32 %v315, %v508
        %v557 = vadd.f32 %v316, %v513
        %v558 = vadd.f32 %v317, %v516
        %v559 = vadd.f32 %v318, %v521
        %v560 = vadd.f32 %v319, %v524
        %v561 = vadd.f32 %v320, %v529
        %v562 = vadd.f32 %v321, %v532
        %v563 = vadd.f32 %v322, %v537
        %v564 = vadd.f32 %v323, %v540
        %v565 = vadd.f32 %v324, %v545
        %v566 = vadd.f32 %v325, %v548
        %567 = vst [vmem:[#allocation2] sm:$0xff] %v551
        %568 = vst [vmem:[#allocation2 + $0x8] sm:$0xff] %v552
        %569 = vst [vmem:[#allocation2 + $0x10] sm:$0xff] %v553
        %570 = vst [vmem:[#allocation2 + $0x18] sm:$0xff] %v554
        %571 = vst [vmem:[#allocation2 + $0x20] sm:$0xff] %v555
        %572 = vst [vmem:[#allocation2 + $0x28] sm:$0xff] %v556
        %573 = vst [vmem:[#allocation2 + $0x30] sm:$0xff] %v557
        %574 = vst [vmem:[#allocation2 + $0x38] sm:$0xff] %v558
        %575 = vst [vmem:[#allocation2 + $0x40] sm:$0xff] %v559
        %576 = vst [vmem:[#allocation2 + $0x48] sm:$0xff] %v560
        %577 = vst [vmem:[#allocation2 + $0x50] sm:$0xff] %v561
        %578 = vst [vmem:[#allocation2 + $0x58] sm:$0xff] %v562
        %579 = vst [vmem:[#allocation2 + $0x60] sm:$0xff] %v563
        %580 = vst [vmem:[#allocation2 + $0x68] sm:$0xff] %v564
        %581 = vst [vmem:[#allocation2 + $0x70] sm:$0xff] %v565
        %582 = vst [vmem:[#allocation2 + $0x78] sm:$0xff] %v566
        %p583 = scmp.eq.s32.totalorder %s29, 1
        // Predicated region
        $region53: #{tpu_custom_call.1} parent=35 // pred_check
          %p584 = pneg %p583
        $region54: #{tpu_custom_call.1} parent=35 // pred_check_branch
          %586 = sbr.rel (%p584) target = $region56
        $region55: #{tpu_custom_call.1} parent=35 // pred_region
          %v587 = vld [vmem:[#allocation2] sm:$0xff]
          %v588 = vld [vmem:[#allocation2 + $0x8] sm:$0xff]
          %v589 = vld [vmem:[#allocation2 + $0x10] sm:$0xff]
          %v590 = vld [vmem:[#allocation2 + $0x18] sm:$0xff]
          %v591 = vld [vmem:[#allocation2 + $0x20] sm:$0xff]
          %v592 = vld [vmem:[#allocation2 + $0x28] sm:$0xff]
          %v593 = vld [vmem:[#allocation2 + $0x30] sm:$0xff]
          %v594 = vld [vmem:[#allocation2 + $0x38] sm:$0xff]
          %v595 = vld [vmem:[#allocation2 + $0x40] sm:$0xff]
          %v596 = vld [vmem:[#allocation2 + $0x48] sm:$0xff]
          %v597 = vld [vmem:[#allocation2 + $0x50] sm:$0xff]
          %v598 = vld [vmem:[#allocation2 + $0x58] sm:$0xff]
          %v599 = vld [vmem:[#allocation2 + $0x60] sm:$0xff]
          %v600 = vld [vmem:[#allocation2 + $0x68] sm:$0xff]
          %v601 = vld [vmem:[#allocation2 + $0x70] sm:$0xff]
          %v602 = vld [vmem:[#allocation2 + $0x78] sm:$0xff]
          %v603 = vpack.c.bf16 %v588, %v587
          %v604 = vpack.c.bf16 %v590, %v589
          %v605 = vpack.c.bf16 %v592, %v591
          %v606 = vpack.c.bf16 %v594, %v593
          %v607 = vpack.c.bf16 %v596, %v595
          %v608 = vpack.c.bf16 %v598, %v597
          %v609 = vpack.c.bf16 %v600, %v599
          %v610 = vpack.c.bf16 %v602, %v601
          %v611 = vld [vmem:[#allocation8] sm:$0xff]
          %v612 = vld [vmem:[#allocation8 + $0x8] sm:$0xff]
          %v613 = vld [vmem:[#allocation8 + $0x10] sm:$0xff]
          %v614 = vld [vmem:[#allocation8 + $0x18] sm:$0xff]
          %v615 = vld [vmem:[#allocation8 + $0x20] sm:$0xff]
          %v616 = vld [vmem:[#allocation8 + $0x28] sm:$0xff]
          %v617 = vld [vmem:[#allocation8 + $0x30] sm:$0xff]
          %v618 = vld [vmem:[#allocation8 + $0x38] sm:$0xff]
          %v619 = vld [vmem:[#allocation8 + $0x40] sm:$0xff]
          %v620 = vld [vmem:[#allocation8 + $0x48] sm:$0xff]
          %v621 = vld [vmem:[#allocation8 + $0x50] sm:$0xff]
          %v622 = vld [vmem:[#allocation8 + $0x58] sm:$0xff]
          %v623 = vld [vmem:[#allocation8 + $0x60] sm:$0xff]
          %v624 = vld [vmem:[#allocation8 + $0x68] sm:$0xff]
          %v625 = vld [vmem:[#allocation8 + $0x70] sm:$0xff]
          %v626 = vld [vmem:[#allocation8 + $0x78] sm:$0xff]
          %v627 = vld [vmem:[%s3] sm:$0x3]
          %v629 = vlaneseq
          %v630 = vshrl.u32 %v629, 7
          %v631 = vsub.s32 0, %v630
          %v632 = vrot.slane %v627, %v631
          %v633 = vlaneseq
          %v634 = vshrl.u32 %v633, 7
          %v635 = vsub.s32 1, %v634
          %v636 = vrot.slane %v627, %v635
          %v655 = vunpack.c.l.b16 %v611
          %v656 = vunpack.c.h.b16 %v611
          %v657 = vunpack.c.l.b16 %v612
          %v658 = vunpack.c.h.b16 %v612
          %v659 = vunpack.c.l.b16 %v613
          %v660 = vunpack.c.h.b16 %v613
          %v661 = vunpack.c.l.b16 %v614
          %v662 = vunpack.c.h.b16 %v614
          %v663 = vunpack.c.l.b16 %v615
          %v664 = vunpack.c.h.b16 %v615
          %v665 = vunpack.c.l.b16 %v616
          %v666 = vunpack.c.h.b16 %v616
          %v667 = vunpack.c.l.b16 %v617
          %v668 = vunpack.c.h.b16 %v617
          %v669 = vunpack.c.l.b16 %v618
          %v670 = vunpack.c.h.b16 %v618
          %v671 = vunpack.c.l.b16 %v619
          %v672 = vunpack.c.h.b16 %v619
          %v673 = vunpack.c.l.b16 %v620
          %v674 = vunpack.c.h.b16 %v620
          %v675 = vunpack.c.l.b16 %v621
          %v676 = vunpack.c.h.b16 %v621
          %v677 = vunpack.c.l.b16 %v622
          %v678 = vunpack.c.h.b16 %v622
          %v679 = vunpack.c.l.b16 %v623
          %v680 = vunpack.c.h.b16 %v623
          %v681 = vunpack.c.l.b16 %v624
          %v682 = vunpack.c.h.b16 %v624
          %v683 = vunpack.c.l.b16 %v625
          %v684 = vunpack.c.h.b16 %v625
          %v685 = vunpack.c.l.b16 %v626
          %v686 = vunpack.c.h.b16 %v626
          %v687 = vpack.c.b16 %v657, %v655
          %v688 = vpack.c.b16 %v658, %v656
          %v689 = vpack.c.b16 %v661, %v659
          %v690 = vpack.c.b16 %v662, %v660
          %v691 = vpack.c.b16 %v665, %v663
          %v692 = vpack.c.b16 %v666, %v664
          %v693 = vpack.c.b16 %v669, %v667
          %v694 = vpack.c.b16 %v670, %v668
          %v695 = vpack.c.b16 %v673, %v671
          %v696 = vpack.c.b16 %v674, %v672
          %v697 = vpack.c.b16 %v677, %v675
          %v698 = vpack.c.b16 %v678, %v676
          %v699 = vpack.c.b16 %v681, %v679
          %v700 = vpack.c.b16 %v682, %v680
          %v701 = vpack.c.b16 %v685, %v683
          %v702 = vpack.c.b16 %v686, %v684
          %719 = vmatprep.subr.bf16.mxu0 %v688
          %720 = vmatpush1.bf16.msra.mxu0 %v687
          %721 = vmatprep.subr.bf16.mxu0 %v690
          %722 = vmatpush1.bf16.msra.mxu0 %v689
          %723 = vmatprep.subr.bf16.mxu0 %v692
          %724 = vmatpush1.bf16.msra.mxu0 %v691
          %725 = vmatprep.subr.bf16.mxu0 %v694
          %726 = vmatpush1.bf16.msra.mxu0 %v693
          %727 = vmatprep.subr.bf16.mxu0 %v696
          %728 = vmatpush1.bf16.msra.mxu0 %v695
          %729 = vmatprep.subr.bf16.mxu0 %v698
          %730 = vmatpush1.bf16.msra.mxu0 %v697
          %731 = vmatprep.subr.bf16.mxu0 %v700
          %732 = vmatpush1.bf16.msra.mxu0 %v699
          %733 = vmatprep.subr.bf16.mxu0 %v702
          %734 = vmatpush1.bf16.msra.mxu0 %v701
          %735 = vmatprep.subr.bf16.mxu0 0
          %736 = vmatpush1.bf16.msra.mxu0 0
          %737 = vmatprep.subr.bf16.mxu0 0
          %738 = vmatpush1.bf16.msra.mxu0 0
          %739 = vmatprep.subr.bf16.mxu0 0
          %740 = vmatpush1.bf16.msra.mxu0 0
          %741 = vmatprep.subr.bf16.mxu0 0
          %742 = vmatpush1.bf16.msra.mxu0 0
          %743 = vmatprep.subr.bf16.mxu0 0
          %744 = vmatpush1.bf16.msra.mxu0 0
          %745 = vmatprep.subr.bf16.mxu0 0
          %746 = vmatpush1.bf16.msra.mxu0 0
          %747 = vmatprep.subr.bf16.mxu0 0
          %748 = vmatpush1.bf16.msra.mxu0 0
          %749 = vmatprep.subr.bf16.mxu0 0
          %750 = vmatpush1.bf16.msra.mxu0 0
          %751 = vmatprep.mubr.bf16.mxu0 0
          %752 = vmatmul.mubr.bf16.gmra.mrb[0].mxu0 %v603
          %v753 = vpop.f32.mrb[0].mxu0
          %v754 = vadd.f32 %v632, %v753
          %v755 = vpop.f32.mrb[0].mxu0
          %v756 = vadd.f32 %v636, %v755
          %v757 = vpop.f32.mrb[0].mxu0
          %v758 = vadd.f32 %v632, %v757
          %v759 = vpop.f32.mrb[0].mxu0
          %v760 = vadd.f32 %v636, %v759
          %761 = vmatprep.mubr.bf16.mxu0 0
          %762 = vmatmul.mubr.bf16.gmra.mrb[0].mxu0 %v604
          %v763 = vpop.f32.mrb[0].mxu0
          %v764 = vadd.f32 %v632, %v763
          %v765 = vpop.f32.mrb[0].mxu0
          %v766 = vadd.f32 %v636, %v765
          %v767 = vpop.f32.mrb[0].mxu0
          %v768 = vadd.f32 %v632, %v767
          %v769 = vpop.f32.mrb[0].mxu0
          %v770 = vadd.f32 %v636, %v769
          %771 = vmatprep.mubr.bf16.mxu0 0
          %772 = vmatmul.mubr.bf16.gmra.mrb[0].mxu0 %v605
          %v773 = vpop.f32.mrb[0].mxu0
          %v774 = vadd.f32 %v632, %v773
          %v775 = vpop.f32.mrb[0].mxu0
          %v776 = vadd.f32 %v636, %v775
          %v777 = vpop.f32.mrb[0].mxu0
          %v778 = vadd.f32 %v632, %v777
          %v779 = vpop.f32.mrb[0].mxu0
          %v780 = vadd.f32 %v636, %v779
          %781 = vmatprep.mubr.bf16.mxu0 0
          %782 = vmatmul.mubr.bf16.gmra.mrb[0].mxu0 %v606
          %v783 = vpop.f32.mrb[0].mxu0
          %v784 = vadd.f32 %v632, %v783
          %v785 = vpop.f32.mrb[0].mxu0
          %v786 = vadd.f32 %v636, %v785
          %v787 = vpop.f32.mrb[0].mxu0
          %v788 = vadd.f32 %v632, %v787
          %v789 = vpop.f32.mrb[0].mxu0
          %v790 = vadd.f32 %v636, %v789
          %791 = vmatprep.mubr.bf16.mxu0 0
          %792 = vmatmul.mubr.bf16.gmra.mrb[0].mxu0 %v607
          %v793 = vpop.f32.mrb[0].mxu0
          %v794 = vadd.f32 %v632, %v793
          %v795 = vpop.f32.mrb[0].mxu0
          %v796 = vadd.f32 %v636, %v795
          %v797 = vpop.f32.mrb[0].mxu0
          %v798 = vadd.f32 %v632, %v797
          %v799 = vpop.f32.mrb[0].mxu0
          %v800 = vadd.f32 %v636, %v799
          %801 = vmatprep.mubr.bf16.mxu0 0
          %802 = vmatmul.mubr.bf16.gmra.mrb[0].mxu0 %v608
          %v803 = vpop.f32.mrb[0].mxu0
          %v804 = vadd.f32 %v632, %v803
          %v805 = vpop.f32.mrb[0].mxu0
          %v806 = vadd.f32 %v636, %v805
          %v807 = vpop.f32.mrb[0].mxu0
          %v808 = vadd.f32 %v632, %v807
          %v809 = vpop.f32.mrb[0].mxu0
          %v810 = vadd.f32 %v636, %v809
          %811 = vmatprep.mubr.bf16.mxu0 0
          %812 = vmatmul.mubr.bf16.gmra.mrb[0].mxu0 %v609
          %v813 = vpop.f32.mrb[0].mxu0
          %v814 = vadd.f32 %v632, %v813
          %v815 = vpop.f32.mrb[0].mxu0
          %v816 = vadd.f32 %v636, %v815
          %v817 = vpop.f32.mrb[0].mxu0
          %v818 = vadd.f32 %v632, %v817
          %v819 = vpop.f32.mrb[0].mxu0
          %v820 = vadd.f32 %v636, %v819
          %821 = vmatprep.mubr.bf16.mxu0 0
          %822 = vmatmul.mubr.bf16.gmra.mrb[0].mxu0 %v610
          %v823 = vpop.f32.mrb[0].mxu0
          %v824 = vadd.f32 %v632, %v823
          %v825 = vpop.f32.mrb[0].mxu0
          %v826 = vadd.f32 %v636, %v825
          %v827 = vpop.f32.mrb[0].mxu0
          %v828 = vadd.f32 %v632, %v827
          %v829 = vpop.f32.mrb[0].mxu0
          %v830 = vadd.f32 %v636, %v829
          %831 = vdwg.mxu0
          %v832 = vmax.f32 %v754, 0.0
          %v833 = vmax.f32 %v756, 0.0
          %v834 = vmax.f32 %v758, 0.0
          %v835 = vmax.f32 %v760, 0.0
          %v836 = vmax.f32 %v764, 0.0
          %v837 = vmax.f32 %v766, 0.0
          %v838 = vmax.f32 %v768, 0.0
          %v839 = vmax.f32 %v770, 0.0
          %v840 = vmax.f32 %v774, 0.0
          %v841 = vmax.f32 %v776, 0.0
          %v842 = vmax.f32 %v778, 0.0
          %v843 = vmax.f32 %v780, 0.0
          %v844 = vmax.f32 %v784, 0.0
          %v845 = vmax.f32 %v786, 0.0
          %v846 = vmax.f32 %v788, 0.0
          %v847 = vmax.f32 %v790, 0.0
          %v848 = vmax.f32 %v794, 0.0
          %v849 = vmax.f32 %v796, 0.0
          %v850 = vmax.f32 %v798, 0.0
          %v851 = vmax.f32 %v800, 0.0
          %v852 = vmax.f32 %v804, 0.0
          %v853 = vmax.f32 %v806, 0.0
          %v854 = vmax.f32 %v808, 0.0
          %v855 = vmax.f32 %v810, 0.0
          %v856 = vmax.f32 %v814, 0.0
          %v857 = vmax.f32 %v816, 0.0
          %v858 = vmax.f32 %v818, 0.0
          %v859 = vmax.f32 %v820, 0.0
          %v860 = vmax.f32 %v824, 0.0
          %v861 = vmax.f32 %v826, 0.0
          %v862 = vmax.f32 %v828, 0.0
          %v863 = vmax.f32 %v830, 0.0
          %v864 = vpack.c.bf16 %v834, %v832
          %v865 = vpack.c.bf16 %v835, %v833
          %v866 = vpack.c.bf16 %v838, %v836
          %v867 = vpack.c.bf16 %v839, %v837
          %v868 = vpack.c.bf16 %v842, %v840
          %v869 = vpack.c.bf16 %v843, %v841
          %v870 = vpack.c.bf16 %v846, %v844
          %v871 = vpack.c.bf16 %v847, %v845
          %v872 = vpack.c.bf16 %v850, %v848
          %v873 = vpack.c.bf16 %v851, %v849
          %v874 = vpack.c.bf16 %v854, %v852
          %v875 = vpack.c.bf16 %v855, %v853
          %v876 = vpack.c.bf16 %v858, %v856
          %v877 = vpack.c.bf16 %v859, %v857
          %v878 = vpack.c.bf16 %v862, %v860
          %v879 = vpack.c.bf16 %v863, %v861
          %v896 = vunpack.c.l.b16 %v864
          %v897 = vunpack.c.l.b16 %v865
          %v898 = vunpack.c.h.b16 %v864
          %v899 = vunpack.c.h.b16 %v865
          %v900 = vunpack.c.l.b16 %v866
          %v901 = vunpack.c.l.b16 %v867
          %v902 = vunpack.c.h.b16 %v866
          %v903 = vunpack.c.h.b16 %v867
          %v904 = vunpack.c.l.b16 %v868
          %v905 = vunpack.c.l.b16 %v869
          %v906 = vunpack.c.h.b16 %v868
          %v907 = vunpack.c.h.b16 %v869
          %v908 = vunpack.c.l.b16 %v870
          %v909 = vunpack.c.l.b16 %v871
          %v910 = vunpack.c.h.b16 %v870
          %v911 = vunpack.c.h.b16 %v871
          %v912 = vunpack.c.l.b16 %v872
          %v913 = vunpack.c.l.b16 %v873
          %v914 = vunpack.c.h.b16 %v872
          %v915 = vunpack.c.h.b16 %v873
          %v916 = vunpack.c.l.b16 %v874
          %v917 = vunpack.c.l.b16 %v875
          %v918 = vunpack.c.h.b16 %v874
          %v919 = vunpack.c.h.b16 %v875
          %v920 = vunpack.c.l.b16 %v876
          %v921 = vunpack.c.l.b16 %v877
          %v922 = vunpack.c.h.b16 %v876
          %v923 = vunpack.c.h.b16 %v877
          %v924 = vunpack.c.l.b16 %v878
          %v925 = vunpack.c.l.b16 %v879
          %v926 = vunpack.c.h.b16 %v878
          %v927 = vunpack.c.h.b16 %v879
          %v928 = vpack.c.b16 %v897, %v896
          %v929 = vpack.c.b16 %v899, %v898
          %v930 = vpack.c.b16 %v901, %v900
          %v931 = vpack.c.b16 %v903, %v902
          %v932 = vpack.c.b16 %v905, %v904
          %v933 = vpack.c.b16 %v907, %v906
          %v934 = vpack.c.b16 %v909, %v908
          %v935 = vpack.c.b16 %v911, %v910
          %v936 = vpack.c.b16 %v913, %v912
          %v937 = vpack.c.b16 %v915, %v914
          %v938 = vpack.c.b16 %v917, %v916
          %v939 = vpack.c.b16 %v919, %v918
          %v940 = vpack.c.b16 %v921, %v920
          %v941 = vpack.c.b16 %v923, %v922
          %v942 = vpack.c.b16 %v925, %v924
          %v943 = vpack.c.b16 %v927, %v926
          %960 = vst [vmem:[%s285] sm:$0xff] %v928
          %961 = vst [vmem:[%s285 + $0x8] sm:$0xff] %v929
          %962 = vst [vmem:[%s285 + $0x10] sm:$0xff] %v930
          %963 = vst [vmem:[%s285 + $0x18] sm:$0xff] %v931
          %964 = vst [vmem:[%s285 + $0x20] sm:$0xff] %v932
          %965 = vst [vmem:[%s285 + $0x28] sm:$0xff] %v933
          %966 = vst [vmem:[%s285 + $0x30] sm:$0xff] %v934
          %967 = vst [vmem:[%s285 + $0x38] sm:$0xff] %v935
          %968 = vst [vmem:[%s285 + $0x40] sm:$0xff] %v936
          %969 = vst [vmem:[%s285 + $0x48] sm:$0xff] %v937
          %970 = vst [vmem:[%s285 + $0x50] sm:$0xff] %v938
          %971 = vst [vmem:[%s285 + $0x58] sm:$0xff] %v939
          %972 = vst [vmem:[%s285 + $0x60] sm:$0xff] %v940
          %973 = vst [vmem:[%s285 + $0x68] sm:$0xff] %v941
          %974 = vst [vmem:[%s285 + $0x70] sm:$0xff] %v942
          %975 = vst [vmem:[%s285 + $0x78] sm:$0xff] %v943
        $region56: #{tpu_custom_call.1} parent=35 // pred_fallthru
          _
        %s976 = sand.u32 %s140, 1
        %s977 = scalar_lea.sflag [#allocation5], %s976
        %s978 = sand.u32 %s140, 1
        %s979 = smul.addr %s978, 128
        %s980 = scalar_lea.vmem [#allocation9], %s979
        // Predicated region
        $region57: #{tpu_custom_call.1} parent=35 // pred_check
          %p981 = pneg %p150
        $region58: #{tpu_custom_call.1} parent=35 // pred_check_branch
          %983 = sbr.rel (%p981) target = $region60
        $region59: #{tpu_custom_call.1} parent=35 // pred_region
          %s984 = smul.u32 16, %s28
          %s986 = ssub.s32 2048, 2048
          %987 = vsyncadd %s977, %s986
          %s988 = smul.addr %s984, 2
          %s989 = smul.addr %s988, 64
          %s990 = scalar_lea.hbm %s4, %s989
          %s991 = sshll.u32 %s980, 4
          %s992 = int_to_ptr.vmem [resolvable:$true] %s991
          %997 = dma.vmem_to_hbm [thread:$0]  %s992, 2048, %s990, %s977, 128, 128, 8
        $region60: #{tpu_custom_call.1} parent=35 // pred_fallthru
          _
      $region36: #{tpu_custom_call.1} parent=5 // pred_fallthru
        _
      %p998 = scmp.le.s32.totalorder 2, %s19
      // Predicated region
      $region61: #{tpu_custom_call.1} parent=5 // pred_check
        %p999 = pneg %p998
      $region62: #{tpu_custom_call.1} parent=5 // pred_check_branch
        %1001 = sbr.rel (%p999) target = $region64
      $region63: #{tpu_custom_call.1} parent=5 // pred_region
        %s1002 = ssub.s32 %s19, 2
        // Predicated region
        $region65: #{tpu_custom_call.1} parent=63 // pred_check
          %p1003 = pneg %p156
        $region66: #{tpu_custom_call.1} parent=63 // pred_check_branch
          %1005 = sbr.rel (%p1003) target = $region68
        $region67: #{tpu_custom_call.1} parent=63 // pred_region
          %s1006 = sand.u32 %s141, 1
          %s1007 = scalar_lea.sflag [#allocation5], %s1006
          %s1008 = sand.u32 %s141, 1
          %s1009 = smul.addr %s1008, 128
          %s1010 = scalar_lea.vmem [#allocation9], %s1009
          %1011 = dma.done %s1007, 2048
        $region68: #{tpu_custom_call.1} parent=63 // pred_fallthru
          _
      $region64: #{tpu_custom_call.1} parent=5 // pred_fallthru
        _
    $region6: #{tpu_custom_call.1} parent=1 // loop_footer
      %s23 = sadd.s32 1, %s19
    $region7: #{tpu_custom_call.1} parent=1 // loop_footer_branch
      %18 = sbr.rel target = $region3
    $region8: #{tpu_custom_call.1} parent=1 // loop_exit
      _
    %1012 = vsyncpa [#allocation4], 1
    %s1013 = scalar_lea.sflag [#allocation4], 1
    %1014 = vsyncpa %s1013, 1
    %1015 = vsyncpa [#allocation7], 1
    %s1016 = scalar_lea.sflag [#allocation7], 1
    %1017 = vsyncpa %s1016, 1
    %1018 = vsyncpa [#allocation5], 1
    %s1019 = scalar_lea.sflag [#allocation5], 1
    %1020 = vsyncpa %s1019, 1

</llo_original>
